<compile_context>
chip_gen: v7x
topology: tpu7x:2x2x1
jax: 0.10.0
libtpu: 0.0.40
codegen_flags: <defaults>
</compile_context>

<pallas_src>
import functools

import jax
import jax.numpy as jnp
from jax.experimental import pallas as pl
from jax.experimental.pallas import tpu as pltpu


def _meanmil_kernel(x_ref, wc_ref, bc_ref, yprobs_ref, ymean_ref,
                    *, n_rows, tile_rows, inv_count):
    i = pl.program_id(0)

    # Initialize the resident (1,1) mean accumulator on the first tile.
    @pl.when(i == 0)
    def _init():
        ymean_ref[...] = jnp.zeros_like(ymean_ref)

    x = x_ref[...]                                                  # (TN, D) native dtype
    y = jnp.dot(x, wc_ref[...], preferred_element_type=jnp.float32)  # (TN, C) f32 acc
    y = y + bc_ref[...]                                             # bias (1, C) f32

    # Per-instance classifier scores (tile of Y_probs).
    yprobs_ref[...] = y.astype(yprobs_ref.dtype)

    # Masked running sum for the bag mean (last tile may contain padding rows).
    row = i * tile_rows + jax.lax.broadcasted_iota(jnp.int32, (tile_rows, 1), 0)
    y_valid = jnp.where(row < n_rows, y, 0.0)
    ymean_ref[...] += jnp.sum(y_valid, keepdims=True)               # (1, 1)

    @pl.when(i == pl.num_programs(0) - 1)
    def _finalize():
        ymean_ref[...] *= inv_count                                  # / (N * C)


def meanmil_forward(x, w_classifier, b_classifier, *, max_tile_rows=512):
    """x: (N, D). w_classifier: (C, D) [PyTorch Linear layout]. b_classifier: (C,).

    Returns (Y_prob scalar, Y_probs (N, C)) matching the PyTorch module.
    """
    x = jnp.asarray(x)
    N, D = x.shape
    C = w_classifier.shape[0]

    wc = jnp.asarray(w_classifier).astype(x.dtype).T                 # (D, C)
    bc = jnp.asarray(b_classifier, jnp.float32).reshape(1, C)        # (1, C)

    # Row-tile size: whole bag if small, else 512-row (multiple of 8) tiles.
    tn = N if N <= max_tile_rows else max_tile_rows
    grid = (pl.cdiv(N, tn),)

    itemsize = jnp.dtype(x.dtype).itemsize
    kernel = functools.partial(
        _meanmil_kernel,
        n_rows=N, tile_rows=tn, inv_count=1.0 / float(N * C),
    )

    y_probs, y_mean = pl.pallas_call(
        kernel,
        out_shape=(
            jax.ShapeDtypeStruct((N, C), x.dtype),     # Y_probs
            jax.ShapeDtypeStruct((1, 1), jnp.float32),  # Y_prob (bag mean)
        ),
        grid=grid,
        in_specs=[
            pl.BlockSpec((tn, D), lambda i: (i, 0)),    # x row tiles (streamed)
            pl.BlockSpec((D, C), lambda i: (0, 0)),     # classifier weight (resident)
            pl.BlockSpec((1, C), lambda i: (0, 0)),     # classifier bias (resident)
        ],
        out_specs=(
            pl.BlockSpec((tn, C), lambda i: (i, 0)),    # Y_probs row tiles
            pl.BlockSpec((1, 1), lambda i: (0, 0)),     # Y_prob accumulator (resident)
        ),
        compiler_params=pltpu.CompilerParams(
            dimension_semantics=("arbitrary",),         # mean is a grid reduction
            vmem_limit_bytes=32 * 1024 * 1024,          # safe on v7x's smaller VMEM
        ),
        cost_estimate=pl.CostEstimate(
            flops=2 * N * D * C,
            transcendentals=0,
            bytes_accessed=N * D * itemsize + D * C * itemsize + N * C * itemsize,
        ),
    )(x, wc, bc)

    return y_mean.reshape(()), y_probs


if __name__ == "__main__":
    key = jax.random.PRNGKey(0)

    # --- Small shapes consistent with the module: N=8 instances, input_size=32,
    #     output_size=1 (single class score per instance). ---
    N, D, C = 8, 32, 1
    kx, kw, kb = jax.random.split(key, 3)
    x = jax.random.normal(kx, (N, D), dtype=jnp.float32)
    w_classifier = 0.1 * jax.random.normal(kw, (C, D), dtype=jnp.float32)
    b_classifier = 0.1 * jax.random.normal(kb, (C,), dtype=jnp.float32)

    y_prob, y_probs = meanmil_forward(x, w_classifier, b_classifier)
    jax.block_until_ready((y_prob, y_probs))

    y_probs_ref = x @ w_classifier.T + b_classifier
    y_prob_ref = jnp.mean(y_probs_ref)
    assert y_probs.shape == (N, C) and y_prob.shape == ()
    assert jnp.allclose(y_probs, y_probs_ref, atol=1e-5, rtol=1e-5)
    assert jnp.allclose(y_prob, y_prob_ref, atol=1e-5, rtol=1e-5)

    # --- Second check: exercise the tiled + masked-tail path (N not a multiple
    #     of the tile size, multi-class output). ---
    N2, D2, C2 = 100, 32, 3
    kx2, kw2, kb2 = jax.random.split(jax.random.PRNGKey(1), 3)
    x2 = jax.random.normal(kx2, (N2, D2), dtype=jnp.float32)
    w2 = 0.1 * jax.random.normal(kw2, (C2, D2), dtype=jnp.float32)
    b2 = 0.1 * jax.random.normal(kb2, (C2,), dtype=jnp.float32)

    y_prob2, y_probs2 = meanmil_forward(x2, w2, b2, max_tile_rows=64)  # grid=2, masked tail
    jax.block_until_ready((y_prob2, y_probs2))

    y_probs2_ref = x2 @ w2.T + b2
    y_prob2_ref = jnp.mean(y_probs2_ref)
    assert jnp.allclose(y_probs2, y_probs2_ref, atol=1e-5, rtol=1e-5)
    assert jnp.allclose(y_prob2, y_prob2_ref, atol=1e-5, rtol=1e-5)

    print("KERNEL_OK")
</pallas_src>

<mosaic_0001>
module attributes {stable_mosaic.version = 11 : i64} {
  func.func @_meanmil_kernel(%arg0: i32, %arg1: memref<8x32xf32, #tpu.memory_space<vmem>>, %arg2: memref<32x1xf32, #tpu.memory_space<vmem>>, %arg3: memref<1x1xf32, #tpu.memory_space<vmem>>, %arg4: memref<8x1xf32, #tpu.memory_space<vmem>>, %arg5: memref<1x1xf32, #tpu.memory_space<vmem>>) attributes {dimension_semantics = [#tpu.dimension_semantics<arbitrary>], iteration_bounds = array<i64: 1>, scalar_prefetch = 0 : i64, scratch_operands = 0 : i64, tpu.core_type = #tpu.core_type<tc>, window_params = [{transform_indices = @transform_0, window_bounds = array<i64: 8, 32>}, {pipeline_mode = #tpu.pipeline_mode<synchronous>, transform_indices = @transform_1, window_bounds = array<i64: 32, 1>}, {pipeline_mode = #tpu.pipeline_mode<synchronous>, transform_indices = @transform_2, window_bounds = array<i64: 1, 1>}, {transform_indices = @transform_3, window_bounds = array<i64: 8, 1>}, {pipeline_mode = #tpu.pipeline_mode<synchronous>, transform_indices = @transform_4, window_bounds = array<i64: 1, 1>}]} {
    %c0_i32 = arith.constant 0 : i32
    %0 = arith.cmpi eq, %arg0, %c0_i32 : i32
    %1 = arith.extui %0 : i1 to i32
    %c0_i32_0 = arith.constant 0 : i32
    %2 = arith.cmpi ne, %1, %c0_i32_0 : i32
    scf.if %2 {
      %cst_17 = arith.constant 0.000000e+00 : f32
      %29 = vector.broadcast %cst_17 : f32 to vector<1x1xf32>
      %c0_18 = arith.constant 0 : index
      %c0_19 = arith.constant 0 : index
      %30 = vector.load %arg5[%c0_18, %c0_19] : memref<1x1xf32, #tpu.memory_space<vmem>>, vector<1x1xf32>
      tpu.vector_store %arg5[%c0_18, %c0_19], %29 {strides = array<i32>} : memref<1x1xf32, #tpu.memory_space<vmem>>, vector<1x1xf32>,
    } else {
    }
    %c0 = arith.constant 0 : index
    %c0_1 = arith.constant 0 : index
    %3 = vector.load %arg1[%c0, %c0_1] : memref<8x32xf32, #tpu.memory_space<vmem>>, vector<8x32xf32>
    %c0_2 = arith.constant 0 : index
    %c0_3 = arith.constant 0 : index
    %4 = vector.load %arg2[%c0_2, %c0_3] : memref<32x1xf32, #tpu.memory_space<vmem>>, vector<32x1xf32>
    %cst = arith.constant dense<0.000000e+00> : vector<8x1xf32>
    %5 = tpu.matmul %3, %4, %cst {dimension_numbers = #tpu.dot_dimension_numbers<[1], [0], [0], [1], [0, 0, 1, 1], [], []>} : vector<8x32xf32>, vector<32x1xf32>, vector<8x1xf32> -> vector<8x1xf32>
    %c0_4 = arith.constant 0 : index
    %c0_5 = arith.constant 0 : index
    %6 = vector.load %arg3[%c0_4, %c0_5] : memref<1x1xf32, #tpu.memory_space<vmem>>, vector<1x1xf32>
    %7 = vector.broadcast %6 : vector<1x1xf32> to vector<8x1xf32>
    %8 = arith.addf %5, %7 : vector<8x1xf32>
    %c0_6 = arith.constant 0 : index
    %c0_7 = arith.constant 0 : index
    %9 = vector.load %arg4[%c0_6, %c0_7] : memref<8x1xf32, #tpu.memory_space<vmem>>, vector<8x1xf32>
    tpu.vector_store %arg4[%c0_6, %c0_7], %8 {strides = array<i32>} : memref<8x1xf32, #tpu.memory_space<vmem>>, vector<8x1xf32>,
    %c8_i32 = arith.constant 8 : i32
    %10 = arith.muli %arg0, %c8_i32 : i32
    %11 = tpu.iota {dimensions = array<i32: 0>} : vector<8x1xi32>
    %12 = vector.broadcast %10 : i32 to vector<8x1xi32>
    %13 = arith.addi %12, %11 : vector<8x1xi32>
    %c8_i32_8 = arith.constant 8 : i32
    %14 = vector.broadcast %c8_i32_8 : i32 to vector<8x1xi32>
    %15 = arith.cmpi slt, %13, %14 : vector<8x1xi32>
    %cst_9 = arith.constant 0.000000e+00 : f32
    %16 = vector.broadcast %cst_9 : f32 to vector<8x1xf32>
    %17 = arith.select %15, %8, %16 : vector<8x1xi1>, vector<8x1xf32>
    %c0_10 = arith.constant 0 : index
    %c0_11 = arith.constant 0 : index
    %18 = vector.load %arg5[%c0_10, %c0_11] : memref<1x1xf32, #tpu.memory_space<vmem>>, vector<1x1xf32>
    %19 = vector.shape_cast %17 : vector<8x1xf32> to vector<1x8x1xf32>
    %cst_12 = arith.constant dense<0.000000e+00> : vector<1xf32>
    %20 = vector.multi_reduction <add>, %19, %cst_12 [1, 2] : vector<1x8x1xf32> to vector<1xf32>
    %21 = vector.shape_cast %20 : vector<1xf32> to vector<1x1x1xf32>
    %22 = vector.extract %21[0, 0, 0] : f32 from vector<1x1x1xf32>
    %23 = vector.broadcast %22 : f32 to vector<1x1xf32>
    %24 = arith.addf %18, %23 : vector<1x1xf32>
    %c0_13 = arith.constant 0 : index
    %c0_14 = arith.constant 0 : index
    %25 = vector.load %arg5[%c0_13, %c0_14] : memref<1x1xf32, #tpu.memory_space<vmem>>, vector<1x1xf32>
    tpu.vector_store %arg5[%c0_13, %c0_14], %24 {strides = array<i32>} : memref<1x1xf32, #tpu.memory_space<vmem>>, vector<1x1xf32>,
    %c0_i32_15 = arith.constant 0 : i32
    %26 = arith.cmpi eq, %arg0, %c0_i32_15 : i32
    %27 = arith.extui %26 : i1 to i32
    %c0_i32_16 = arith.constant 0 : i32
    %28 = arith.cmpi ne, %27, %c0_i32_16 : i32
    scf.if %28 {
      %c0_17 = arith.constant 0 : index
      %c0_18 = arith.constant 0 : index
      %29 = vector.load %arg5[%c0_17, %c0_18] : memref<1x1xf32, #tpu.memory_space<vmem>>, vector<1x1xf32>
      %cst_19 = arith.constant 1.250000e-01 : f32
      %30 = vector.broadcast %cst_19 : f32 to vector<1x1xf32>
      %31 = arith.mulf %29, %30 : vector<1x1xf32>
      %c0_20 = arith.constant 0 : index
      %c0_21 = arith.constant 0 : index
      %32 = vector.load %arg5[%c0_20, %c0_21] : memref<1x1xf32, #tpu.memory_space<vmem>>, vector<1x1xf32>
      tpu.vector_store %arg5[%c0_20, %c0_21], %31 {strides = array<i32>} : memref<1x1xf32, #tpu.memory_space<vmem>>, vector<1x1xf32>,
    } else {
    }
    return
  }
  func.func @transform_0(%arg0: i32) -> (i32, i32) {
    %c0_i32 = arith.constant 0 : i32
    %c0_i32_0 = arith.constant 0 : i32
    return %arg0, %c0_i32 : i32, i32
  }
  func.func @transform_1(%arg0: i32) -> (i32, i32) {
    %c0_i32 = arith.constant 0 : i32
    %c0_i32_0 = arith.constant 0 : i32
    %c0_i32_1 = arith.constant 0 : i32
    return %c0_i32, %c0_i32_0 : i32, i32
  }
  func.func @transform_2(%arg0: i32) -> (i32, i32) {
    %c0_i32 = arith.constant 0 : i32
    %c0_i32_0 = arith.constant 0 : i32
    %c0_i32_1 = arith.constant 0 : i32
    return %c0_i32, %c0_i32_0 : i32, i32
  }
  func.func @transform_3(%arg0: i32) -> (i32, i32) {
    %c0_i32 = arith.constant 0 : i32
    %c0_i32_0 = arith.constant 0 : i32
    return %arg0, %c0_i32 : i32, i32
  }
  func.func @transform_4(%arg0: i32) -> (i32, i32) {
    %c0_i32 = arith.constant 0 : i32
    %c0_i32_0 = arith.constant 0 : i32
    %c0_i32_1 = arith.constant 0 : i32
    return %c0_i32, %c0_i32_0 : i32, i32
  }
}

</mosaic_0001>

<llo_original>
// kernel: tpu_custom_call.1
$region0: #{tpu_custom_call.1}
  #allocation0 [shape = 'u32[]', space=smem, size = 0x4, offset = 0x4, fixed_abs, tag = 'smem constant byte address 0x4 - core index']
  #allocation1 [shape = 'u32[144,128]{1,0:T(1,128)}', space=vmem, size = 0x12000, scoped, tag = 'internal scratch']
  #allocation2 [shape = 'f32[1,1]{1,0:T(1,128)S(1)}', space=vmem, size = 0x200, scoped, tag = 'scoped memory for tpu_custom_call.1']
  %s0 = inlined_call_operand.vmem [shape: f32[8,32], index: 0, kind: input, shape index: {}]
  %s1 = inlined_call_operand.vmem [shape: f32[32,1], index: 1, kind: input, shape index: {}]
  %s2 = inlined_call_operand.<no memory space> [shape: f32[1,1], index: 2, kind: input, shape index: {}]
  %s3 = inlined_call_operand.vmem [shape: f32[8,1], index: 3, kind: output, shape index: {0}]
  %s4 = inlined_call_operand.hbm [shape: f32[1,1], index: 4, kind: output, shape index: {1}]
  %5 = xla_tuple %s3, %s4
  %s6 = sld [smem:[#allocation0]]
  $region38: #{tpu_custom_call.1} parent=0
    _
  %s8 = ssub.s32 1, %s6
  %s9 = scalar_select 0, %s8, %s6
  %v10 = vstv %s2
  %11 = vst [vmem:[#allocation2] sm:$0x1] %v10
  $region1: #{tpu_custom_call.1} parent=0
    #allocation3 [shape = 'u8[512]{0}', space=vmem, size = 0x400, scoped, tag = 'output window, operand 1, single buffered']
    #allocation4 [shape = 's32[1]{0}', space=sflag, size = 0x4, scoped, tag = 'scoped memory for tpu_custom_call.1']
    %12 = vsyncpa [#allocation4], 0
    // Predicated region
    $region2: #{tpu_custom_call.1} parent=1 // pred_check
      _
    $region3: #{tpu_custom_call.1} parent=1 // pred_check_branch
      %14 = sbr.rel (0) target = $region5
    $region4: #{tpu_custom_call.1} parent=1 // pred_region
      _
    $region5: #{tpu_custom_call.1} parent=1 // pred_fallthru
      _
    // Predicated region
    $region6: #{tpu_custom_call.1} parent=1 // pred_check
      _
    $region7: #{tpu_custom_call.1} parent=1 // pred_check_branch
      %16 = sbr.rel (0) target = $region9
    $region8: #{tpu_custom_call.1} parent=1 // pred_region
      _
    $region9: #{tpu_custom_call.1} parent=1 // pred_fallthru
      _
    // Predicated region
    $region10: #{tpu_custom_call.1} parent=1 // pred_check
      _
    $region11: #{tpu_custom_call.1} parent=1 // pred_check_branch
      %18 = sbr.rel (0) target = $region13
    $region12: #{tpu_custom_call.1} parent=1 // pred_region
      _
    $region13: #{tpu_custom_call.1} parent=1 // pred_fallthru
      _
    %p19 = scmp.eq.s32.totalorder 0, 0
    // Predicated region
    $region14: #{tpu_custom_call.1} parent=1 // pred_check
      %p20 = pneg %p19
    $region15: #{tpu_custom_call.1} parent=1 // pred_check_branch
      %22 = sbr.rel (%p20) target = $region17
    $region16: #{tpu_custom_call.1} parent=1 // pred_region
      %vm23 = vcmask 0
      %24 = vst.msk [vmem:[#allocation3] sm:$0x1] %vm23, 0.0
    $region17: #{tpu_custom_call.1} parent=1 // pred_fallthru
      _
    %v25 = vld [vmem:[%s0] sm:$0xff]
    %v26 = vld [vmem:[%s1] sm:$0xff]
    %v27 = vld [vmem:[%s1 + $0x8] sm:$0xff]
    %v28 = vld [vmem:[%s1 + $0x10] sm:$0xff]
    %v29 = vld [vmem:[%s1 + $0x18] sm:$0xff]
    %v30 = vld [vmem:[#allocation2] sm:$0x1]
    %v32 = vlaneseq
    %v33 = vshrl.u32 %v32, 7
    %v34 = vsub.s32 0, %v33
    %v35 = vrot.slane %v30, %v34
    %vm37 = vcmask 261120
    %v39 = vsel %vm37, %v25, 0
    %41 = vmatprep.subr.mxu0 0.0
    %42 = vmatpush1.msra.mxu0 %v26
    %43 = vmatprep.subr.mxu0 0.0
    %44 = vmatpush1.msra.mxu0 %v27
    %45 = vmatprep.subr.mxu0 0.0
    %46 = vmatpush1.msra.mxu0 %v28
    %47 = vmatprep.subr.mxu0 0.0
    %48 = vmatpush1.msra.mxu0 %v29
    %49 = vmatprep.subr.mxu0 0.0
    %50 = vmatpush1.msra.mxu0 0.0
    %51 = vmatprep.subr.mxu0 0.0
    %52 = vmatpush1.msra.mxu0 0.0
    %53 = vmatprep.subr.mxu0 0.0
    %54 = vmatpush1.msra.mxu0 0.0
    %55 = vmatprep.subr.mxu0 0.0
    %56 = vmatpush1.msra.mxu0 0.0
    %57 = vmatprep.subr.mxu0 0.0
    %58 = vmatpush1.msra.mxu0 0.0
    %59 = vmatprep.subr.mxu0 0.0
    %60 = vmatpush1.msra.mxu0 0.0
    %61 = vmatprep.subr.mxu0 0.0
    %62 = vmatpush1.msra.mxu0 0.0
    %63 = vmatprep.subr.mxu0 0.0
    %64 = vmatpush1.msra.mxu0 0.0
    %65 = vmatprep.subr.mxu0 0.0
    %66 = vmatpush1.msra.mxu0 0.0
    %67 = vmatprep.subr.mxu0 0.0
    %68 = vmatpush1.msra.mxu0 0.0
    %69 = vmatprep.subr.mxu0 0.0
    %70 = vmatpush1.msra.mxu0 0.0
    %71 = vmatprep.subr.mxu0 0.0
    %72 = vmatpush1.msra.mxu0 0.0
    %73 = vmatprep.subr.mxu0 0.0
    %74 = vmatpush1.msra.mxu0 0.0
    %75 = vmatprep.subr.mxu0 0.0
    %76 = vmatpush1.msra.mxu0 0.0
    %77 = vmatprep.subr.mxu0 0.0
    %78 = vmatpush1.msra.mxu0 0.0
    %79 = vmatprep.subr.mxu0 0.0
    %80 = vmatpush1.msra.mxu0 0.0
    %81 = vmatprep.subr.mxu0 0.0
    %82 = vmatpush1.msra.mxu0 0.0
    %83 = vmatprep.subr.mxu0 0.0
    %84 = vmatpush1.msra.mxu0 0.0
    %85 = vmatprep.subr.mxu0 0.0
    %86 = vmatpush1.msra.mxu0 0.0
    %87 = vmatprep.subr.mxu0 0.0
    %88 = vmatpush1.msra.mxu0 0.0
    %89 = vmatprep.subr.mxu0 0.0
    %90 = vmatpush1.msra.mxu0 0.0
    %91 = vmatprep.subr.mxu0 0.0
    %92 = vmatpush1.msra.mxu0 0.0
    %93 = vmatprep.subr.mxu0 0.0
    %94 = vmatpush1.msra.mxu0 0.0
    %95 = vmatprep.subr.mxu0 0.0
    %96 = vmatpush1.msra.mxu0 0.0
    %97 = vmatprep.subr.mxu0 0.0
    %98 = vmatpush1.msra.mxu0 0.0
    %99 = vmatprep.subr.mxu0 0.0
    %100 = vmatpush1.msra.mxu0 0.0
    %101 = vmatprep.subr.mxu0 0.0
    %102 = vmatpush1.msra.mxu0 0.0
    %103 = vmatprep.subr.mxu0 0.0
    %104 = vmatpush1.msra.mxu0 0.0
    %105 = vmatprep.mubr.f32.mxu0 0.0
    %106 = vmatmul.mubr.f32.gmra.mrb[0].mxu0 %v39
    %v107 = vpop.f32.mrb[0].mxu0
    %v108 = vadd.f32 %v35, %v107
    %v109 = vpop.f32.mrb[0].mxu0
    %110 = vdwg.mxu0
    %vm111 = vcmask 7168
    %112 = vst.msk [vmem:[%s3] sm:$0xff] %vm111, %v108
    %s113 = smul.u32 0, 8
    %v114 = vlaneseq
    %v115 = vshrl.u32 %v114, 7
    %v116 = vstv %s113
    %v117 = vadd.s32 %v116, %v115
    %vm118 = vcmp.lt.s32.totalorder %v117, 8
    %v119 = vsel %vm118, %v108, 0.0
    %v120 = vld [vmem:[#allocation3] sm:$0x1]
    %v121 = vsel %vm111, %v119, 0.0
    %122 = vadd.xlane.f32.xlu0 %v121
    %v123 = vpop.xlane.xlu0 %122
    %v124 = vrot.slane %v123, 4
    %v125 = vadd.f32 %v123, %v124
    %v126 = vrot.slane %v125, 2
    %v127 = vadd.f32 %v125, %v126
    %v128 = vrot.slane %v127, 1
    %v129 = vadd.f32 %v127, %v128
    %s130 = vtos %v129
    %v131 = vstv %s130
    %v132 = vadd.f32 %v120, %v131
    %vm133 = vcmask 0
    %134 = vst.msk [vmem:[#allocation3] sm:$0x1] %vm133, %v132
    // Predicated region
    $region18: #{tpu_custom_call.1} parent=1 // pred_check
      %p135 = pneg %p19
    $region19: #{tpu_custom_call.1} parent=1 // pred_check_branch
      %137 = sbr.rel (%p135) target = $region21
    $region20: #{tpu_custom_call.1} parent=1 // pred_region
      %v138 = vld [vmem:[#allocation3] sm:$0x1]
      %v139 = vmul.f32 %v138, 0.125
      %140 = vst.msk [vmem:[#allocation3] sm:$0x1] %vm133, %v139
    $region21: #{tpu_custom_call.1} parent=1 // pred_fallthru
      _
    // Predicated region
    $region22: #{tpu_custom_call.1} parent=1 // pred_check
      _
    $region23: #{tpu_custom_call.1} parent=1 // pred_check_branch
      %142 = sbr.rel (0) target = $region25
    $region24: #{tpu_custom_call.1} parent=1 // pred_region
      _
    $region25: #{tpu_custom_call.1} parent=1 // pred_fallthru
      _
    // Predicated region
    $region26: #{tpu_custom_call.1} parent=1 // pred_check
      _
    $region27: #{tpu_custom_call.1} parent=1 // pred_check_branch
      %144 = sbr.rel (0) target = $region29
    $region28: #{tpu_custom_call.1} parent=1 // pred_region
      %s146 = ssub.s32 16, 16
      %147 = vsyncadd [#allocation4], %s146
      %s149 = sshll.u32 [#allocation3], 4
      %s150 = int_to_ptr.vmem [resolvable:$true] %s149
      %152 = dma.vmem_to_hbm [thread:$0]  %s150, 16, %s4, [#allocation4]
    $region29: #{tpu_custom_call.1} parent=1 // pred_fallthru
      _
    // Predicated region
    $region30: #{tpu_custom_call.1} parent=1 // pred_check
      _
    $region31: #{tpu_custom_call.1} parent=1 // pred_check_branch
      %154 = sbr.rel (0) target = $region33
    $region32: #{tpu_custom_call.1} parent=1 // pred_region
      _
    $region33: #{tpu_custom_call.1} parent=1 // pred_fallthru
      _
    // Predicated region
    $region34: #{tpu_custom_call.1} parent=1 // pred_check
      _
    $region35: #{tpu_custom_call.1} parent=1 // pred_check_branch
      %156 = sbr.rel (0) target = $region37
    $region36: #{tpu_custom_call.1} parent=1 // pred_region
      %157 = dma.done [#allocation4], 16
    $region37: #{tpu_custom_call.1} parent=1 // pred_fallthru
      _
    %158 = vsyncpa [#allocation4], 1

</llo_original>
